<compile_context>
chip_gen: v7x
topology: tpu7x:2x2x1
jax: 0.10.0
libtpu: 0.0.40
codegen_flags: <defaults>
</compile_context>

<pallas_src>
from functools import partial

import jax
import jax.numpy as jnp
from jax.experimental import pallas as pl
from jax.experimental.pallas import tpu as pltpu


# ----------------------------------------------------------------------------
# small helpers
# ----------------------------------------------------------------------------
def _round_up(x, m):
    return ((x + m - 1) // m) * m


def _pad2(a, rows, cols):
    r, c = a.shape
    if r == rows and c == cols:
        return a
    return jnp.pad(a, ((0, rows - r), (0, cols - c)))


def _sigmoid_f32(x):
    # 1 / (1 + exp(-x)); divide routed to the EUP approx-reciprocal slot.
    return pl.reciprocal(1.0 + jnp.exp(-x), approx=True)


# ----------------------------------------------------------------------------
# Kernel 1: tiled  out = act(x @ w + b)   (used for the conv-as-matmul layer)
# ----------------------------------------------------------------------------
def _matmul_bias_act_kernel(x_ref, w_ref, b_ref, o_ref, acc_ref, *, activation):
    @pl.when(pl.program_id(2) == 0)
    def _():
        acc_ref[...] = jnp.zeros_like(acc_ref)

    acc_ref[...] += jnp.dot(x_ref[...], w_ref[...],
                            preferred_element_type=jnp.float32)

    @pl.when(pl.program_id(2) == pl.num_programs(2) - 1)
    def _():
        acc = acc_ref[...] + b_ref[...]          # (tm, tn) + (1, tn), f32
        if activation == "relu":
            acc = jnp.maximum(acc, 0.0)
        elif activation == "sigmoid":
            acc = _sigmoid_f32(acc)
        elif activation is not None:
            raise ValueError(f"unknown activation {activation!r}")
        o_ref[...] = acc.astype(o_ref.dtype)


def matmul_bias_act(x, w, b, activation, out_dtype=jnp.float32,
                    max_tm=256, max_tn=256, max_tk=512):
    """x:(M,K) @ w:(K,N) + b:(N,) with fused bias+activation. Returns (M,N)."""
    M, K = x.shape
    K2, N = w.shape
    assert K == K2 and b.shape == (N,)

    tm = min(max_tm, _round_up(M, 8))
    tn = min(max_tn, _round_up(N, 128))
    tk = min(max_tk, _round_up(K, 128))
    Mp, Np, Kp = _round_up(M, tm), _round_up(N, tn), _round_up(K, tk)

    xp = _pad2(x.astype(jnp.bfloat16), Mp, Kp)
    wp = _pad2(w.astype(jnp.bfloat16), Kp, Np)
    bp = _pad2(b.reshape(1, N).astype(jnp.float32), 1, Np)

    out = pl.pallas_call(
        partial(_matmul_bias_act_kernel, activation=activation),
        out_shape=jax.ShapeDtypeStruct((Mp, Np), out_dtype),
        grid=(Mp // tm, Np // tn, Kp // tk),
        in_specs=[
            pl.BlockSpec((tm, tk), lambda i, j, k: (i, k)),
            pl.BlockSpec((tk, tn), lambda i, j, k: (k, j)),
            pl.BlockSpec((1, tn), lambda i, j, k: (0, j)),   # bias per N-tile
        ],
        out_specs=pl.BlockSpec((tm, tn), lambda i, j, k: (i, j)),
        scratch_shapes=[pltpu.VMEM((tm, tn), jnp.float32)],
        compiler_params=pltpu.CompilerParams(
            dimension_semantics=("parallel", "parallel", "arbitrary"),
            vmem_limit_bytes=32 * 1024 * 1024,
        ),
    )(xp, wp, bp)
    return out[:M, :N]


# ----------------------------------------------------------------------------
# Kernel 2: fused MLP head  sigmoid(relu(x @ w1 + b1) @ w2 + b2)
#   - K reduction of fc1 is the (only) grid axis; the (B, H) hidden activation
#     stays in a VMEM f32 scratch and never round-trips through HBM.
#   - fc2 (N=1 head) runs in the epilogue; output is lane-dense (padded to 128).
# ----------------------------------------------------------------------------
def _mlp_head_kernel(x_ref, w1_ref, b1_ref, w2_ref, b2_ref, o_ref, acc_ref):
    @pl.when(pl.program_id(0) == 0)
    def _():
        acc_ref[...] = jnp.zeros_like(acc_ref)

    acc_ref[...] += jnp.dot(x_ref[...], w1_ref[...],
                            preferred_element_type=jnp.float32)

    @pl.when(pl.program_id(0) == pl.num_programs(0) - 1)
    def _():
        h = jnp.maximum(acc_ref[...] + b1_ref[...], 0.0)           # fc1 + ReLU, f32
        logits = jnp.dot(h, w2_ref[...],
                         preferred_element_type=jnp.float32) + b2_ref[...]
        o_ref[...] = _sigmoid_f32(logits).astype(o_ref.dtype)


def mlp_head(x, w1, b1, w2, b2, max_tk=512):
    """sigmoid(relu(x @ w1 + b1) @ w2 + b2) in one pallas_call. Returns (B, T)."""
    B, K = x.shape
    K2, H = w1.shape
    H2, T = w2.shape
    assert K == K2 and H == H2 and b1.shape == (H,) and b2.shape == (T,)

    Bp = _round_up(B, 8)
    Hp = _round_up(H, 128)
    Tp = _round_up(T, 128)
    tk = min(max_tk, _round_up(K, 128))
    Kp = _round_up(K, tk)

    xp = _pad2(x.astype(jnp.bfloat16), Bp, Kp)
    w1p = _pad2(w1.astype(jnp.bfloat16), Kp, Hp)
    b1p = _pad2(b1.reshape(1, H).astype(jnp.float32), 1, Hp)
    w2p = _pad2(w2.astype(jnp.float32), Hp, Tp)
    b2p = _pad2(b2.reshape(1, T).astype(jnp.float32), 1, Tp)

    out = pl.pallas_call(
        _mlp_head_kernel,
        out_shape=jax.ShapeDtypeStruct((Bp, Tp), jnp.float32),
        grid=(Kp // tk,),
        in_specs=[
            pl.BlockSpec((Bp, tk), lambda k: (0, k)),
            pl.BlockSpec((tk, Hp), lambda k: (k, 0)),
            pl.BlockSpec((1, Hp), lambda k: (0, 0)),
            pl.BlockSpec((Hp, Tp), lambda k: (0, 0)),
            pl.BlockSpec((1, Tp), lambda k: (0, 0)),
        ],
        out_specs=pl.BlockSpec((Bp, Tp), lambda k: (0, 0)),
        scratch_shapes=[pltpu.VMEM((Bp, Hp), jnp.float32)],
        compiler_params=pltpu.CompilerParams(
            dimension_semantics=("arbitrary",),
            vmem_limit_bytes=32 * 1024 * 1024,
        ),
    )(xp, w1p, b1p, w2p, b2p)
    return out[:B, :T]


# ----------------------------------------------------------------------------
# Glue: im2col in NHWC (single concat of strided slices; no 5-D stack+transpose)
# Patch feature ordering is (kh, kw, C); the conv weight is re-laid-out to match.
# ----------------------------------------------------------------------------
def im2col_nhwc(x_nchw, kh, kw, stride):
    n, c, h, w = x_nchw.shape
    oh = (h - kh) // stride + 1
    ow = (w - kw) // stride + 1
    x = jnp.transpose(x_nchw, (0, 2, 3, 1))  # NHWC, one layout pass
    cols = [
        x[:, i:i + stride * oh:stride, j:j + stride * ow:stride, :]
        for i in range(kh) for j in range(kw)
    ]
    patches = jnp.concatenate(cols, axis=-1)              # (N, oh, ow, kh*kw*C)
    return patches.reshape(n * oh * ow, kh * kw * c), oh, ow


# ----------------------------------------------------------------------------
# ConvNet forward
# ----------------------------------------------------------------------------
def convnet_forward(x, params, kernel_size, stride):
    conv_w, conv_b, fc1_w, fc1_b, fc2_w, fc2_b = params
    n = x.shape[0]
    inter = conv_w.shape[0]                 # conv output channels
    fc1_out = fc1_w.shape[0]
    num_targets = fc2_w.shape[0]

    # Conv2d + ReLU via im2col + tiled fused matmul kernel (bf16 MXU, f32 acc).
    patches, oh, ow = im2col_nhwc(x, kernel_size, kernel_size, stride)
    assert fc1_w.shape[1] == inter * oh * ow

    # Static weight re-layouts (done once, outside the kernels):
    #   conv weight (O,C,KH,KW) -> (KH*KW*C, O) to match (kh,kw,C) patch order.
    w_conv = jnp.transpose(conv_w, (2, 3, 1, 0)).reshape(-1, inter)
    #   fc1 weight columns permuted from NCHW-flatten order to the HWC order the
    #   conv kernel's output naturally has -> no runtime activation transpose.
    w_fc1 = jnp.transpose(
        fc1_w.reshape(fc1_out, inter, oh, ow), (0, 2, 3, 1)
    ).reshape(fc1_out, oh * ow * inter).T                  # (oh*ow*inter, fc1_out)
    w_fc2 = fc2_w.T                                        # (inter, num_targets)

    conv_out = matmul_bias_act(patches, w_conv, conv_b, "relu",
                               out_dtype=jnp.bfloat16)     # (n*oh*ow, inter)
    x_flat = conv_out.reshape(n, oh * ow * inter)          # HWC flatten (matches w_fc1)

    # fc1 -> ReLU -> fc2 -> Sigmoid, fused in a single pallas_call.
    out = mlp_head(x_flat, w_fc1, fc1_b, w_fc2, fc2_b)     # (n, num_targets) f32
    return out


# ----------------------------------------------------------------------------
# Pure-JAX f32 reference (PyTorch semantics) for sanity check
# ----------------------------------------------------------------------------
def convnet_forward_ref(x, params, kernel_size, stride):
    conv_w, conv_b, fc1_w, fc1_b, fc2_w, fc2_b = params
    y = jax.lax.conv_general_dilated(
        x, conv_w, window_strides=(stride, stride), padding="VALID",
        dimension_numbers=("NCHW", "OIHW", "NCHW"),
    ) + conv_b[None, :, None, None]
    y = jnp.maximum(y, 0.0)
    y = y.reshape(x.shape[0], -1)                          # NCHW flatten
    y = jnp.maximum(y @ fc1_w.T + fc1_b, 0.0)
    y = jax.nn.sigmoid(y @ fc2_w.T + fc2_b)
    return y


if __name__ == "__main__":
    # Small deterministic config consistent with the module's __init__ args.
    batch = 2
    num_features = 4          # input channels
    spatial = 16
    kernel_size = 3
    stride = 2
    intermediate_size = 32
    num_targets = 1
    oh = (spatial - kernel_size) // stride + 1
    linear_layer_size = intermediate_size * oh * oh        # 32*7*7 = 1568

    key = jax.random.PRNGKey(0)
    k_x, k_cw, k_cb, k_w1, k_b1, k_w2, k_b2 = jax.random.split(key, 7)

    x = jax.random.normal(k_x, (batch, num_features, spatial, spatial), jnp.float32)

    conv_w = 0.1 * jax.random.normal(
        k_cw, (intermediate_size, num_features, kernel_size, kernel_size), jnp.float32)
    conv_b = 0.1 * jax.random.normal(k_cb, (intermediate_size,), jnp.float32)
    fc1_w = 0.05 * jax.random.normal(
        k_w1, (intermediate_size, linear_layer_size), jnp.float32)
    fc1_b = 0.1 * jax.random.normal(k_b1, (intermediate_size,), jnp.float32)
    fc2_w = 0.1 * jax.random.normal(k_w2, (num_targets, intermediate_size), jnp.float32)
    fc2_b = 0.1 * jax.random.normal(k_b2, (num_targets,), jnp.float32)

    params = (conv_w, conv_b, fc1_w, fc1_b, fc2_w, fc2_b)

    fwd = jax.jit(partial(convnet_forward, kernel_size=kernel_size, stride=stride))
    out = jax.block_until_ready(fwd(x, params))

    ref = convnet_forward_ref(x, params, kernel_size, stride)
    assert out.shape == (batch, num_targets)
    # bf16 MXU operands + approx-reciprocal sigmoid vs the pure-f32 reference.
    assert jnp.allclose(out, ref, atol=2e-2, rtol=2e-2), (
        f"max abs diff {jnp.max(jnp.abs(out - ref))}")

    print("KERNEL_OK")
</pallas_src>

<mosaic_0001>
module attributes {stable_mosaic.version = 11 : i64} {
  func.func @_matmul_bias_act_kernel(%arg0: i32, %arg1: i32, %arg2: i32, %arg3: memref<104x128xbf16, #tpu.memory_space<vmem>>, %arg4: memref<128x128xbf16, #tpu.memory_space<vmem>>, %arg5: memref<1x128xf32, #tpu.memory_space<vmem>>, %arg6: memref<104x128xbf16, #tpu.memory_space<vmem>>, %arg7: memref<104x128xf32, #tpu.memory_space<vmem>>) attributes {dimension_semantics = [#tpu.dimension_semantics<parallel>, #tpu.dimension_semantics<parallel>, #tpu.dimension_semantics<arbitrary>], iteration_bounds = array<i64: 1, 1, 1>, scalar_prefetch = 0 : i64, scratch_operands = 1 : i64, tpu.core_type = #tpu.core_type<tc>, window_params = [{transform_indices = @transform_0, window_bounds = array<i64: 104, 128>}, {transform_indices = @transform_1, window_bounds = array<i64: 128, 128>}, {transform_indices = @transform_2, window_bounds = array<i64: 1, 128>}, {transform_indices = @transform_3, window_bounds = array<i64: 104, 128>}]} {
    %c0_i32 = arith.constant 0 : i32
    %0 = arith.cmpi eq, %arg2, %c0_i32 : i32
    %1 = arith.extui %0 : i1 to i32
    %c0_i32_0 = arith.constant 0 : i32
    %2 = arith.cmpi ne, %1, %c0_i32_0 : i32
    scf.if %2 {
      %cst_10 = arith.constant 0.000000e+00 : f32
      %12 = vector.broadcast %cst_10 : f32 to vector<104x128xf32>
      %c0_11 = arith.constant 0 : index
      %c0_12 = arith.constant 0 : index
      %13 = vector.load %arg7[%c0_11, %c0_12] : memref<104x128xf32, #tpu.memory_space<vmem>>, vector<104x128xf32>
      tpu.vector_store %arg7[%c0_11, %c0_12], %12 {strides = array<i32>} : memref<104x128xf32, #tpu.memory_space<vmem>>, vector<104x128xf32>,
    } else {
    }
    %c0 = arith.constant 0 : index
    %c0_1 = arith.constant 0 : index
    %3 = vector.load %arg7[%c0, %c0_1] : memref<104x128xf32, #tpu.memory_space<vmem>>, vector<104x128xf32>
    %c0_2 = arith.constant 0 : index
    %c0_3 = arith.constant 0 : index
    %4 = vector.load %arg3[%c0_2, %c0_3] : memref<104x128xbf16, #tpu.memory_space<vmem>>, vector<104x128xbf16>
    %c0_4 = arith.constant 0 : index
    %c0_5 = arith.constant 0 : index
    %5 = vector.load %arg4[%c0_4, %c0_5] : memref<128x128xbf16, #tpu.memory_space<vmem>>, vector<128x128xbf16>
    %cst = arith.constant dense<0.000000e+00> : vector<104x128xf32>
    %6 = tpu.matmul %4, %5, %cst {dimension_numbers = #tpu.dot_dimension_numbers<[1], [0], [0], [1], [0, 0, 1, 1], [], []>} : vector<104x128xbf16>, vector<128x128xbf16>, vector<104x128xf32> -> vector<104x128xf32>
    %7 = arith.addf %3, %6 : vector<104x128xf32>
    %c0_6 = arith.constant 0 : index
    %c0_7 = arith.constant 0 : index
    %8 = vector.load %arg7[%c0_6, %c0_7] : memref<104x128xf32, #tpu.memory_space<vmem>>, vector<104x128xf32>
    tpu.vector_store %arg7[%c0_6, %c0_7], %7 {strides = array<i32>} : memref<104x128xf32, #tpu.memory_space<vmem>>, vector<104x128xf32>,
    %c0_i32_8 = arith.constant 0 : i32
    %9 = arith.cmpi eq, %arg2, %c0_i32_8 : i32
    %10 = arith.extui %9 : i1 to i32
    %c0_i32_9 = arith.constant 0 : i32
    %11 = arith.cmpi ne, %10, %c0_i32_9 : i32
    scf.if %11 {
      %c0_10 = arith.constant 0 : index
      %c0_11 = arith.constant 0 : index
      %12 = vector.load %arg7[%c0_10, %c0_11] : memref<104x128xf32, #tpu.memory_space<vmem>>, vector<104x128xf32>
      %c0_12 = arith.constant 0 : index
      %c0_13 = arith.constant 0 : index
      %13 = vector.load %arg5[%c0_12, %c0_13] : memref<1x128xf32, #tpu.memory_space<vmem>>, vector<1x128xf32>
      %14 = vector.broadcast %13 : vector<1x128xf32> to vector<104x128xf32>
      %15 = arith.addf %12, %14 : vector<104x128xf32>
      %cst_14 = arith.constant 0.000000e+00 : f32
      %16 = vector.broadcast %cst_14 : f32 to vector<104x128xf32>
      %17 = arith.maximumf %15, %16 : vector<104x128xf32>
      %18 = arith.truncf %17 : vector<104x128xf32> to vector<104x128xbf16>
      %c0_15 = arith.constant 0 : index
      %c0_16 = arith.constant 0 : index
      %19 = vector.load %arg6[%c0_15, %c0_16] : memref<104x128xbf16, #tpu.memory_space<vmem>>, vector<104x128xbf16>
      tpu.vector_store %arg6[%c0_15, %c0_16], %18 {strides = array<i32>} : memref<104x128xbf16, #tpu.memory_space<vmem>>, vector<104x128xbf16>,
    } else {
    }
    return
  }
  func.func @transform_0(%arg0: i32, %arg1: i32, %arg2: i32) -> (i32, i32) {
    %c0_i32 = arith.constant 0 : i32
    return %arg0, %arg2 : i32, i32
  }
  func.func @transform_1(%arg0: i32, %arg1: i32, %arg2: i32) -> (i32, i32) {
    %c0_i32 = arith.constant 0 : i32
    return %arg2, %arg1 : i32, i32
  }
  func.func @transform_2(%arg0: i32, %arg1: i32, %arg2: i32) -> (i32, i32) {
    %c0_i32 = arith.constant 0 : i32
    %c0_i32_0 = arith.constant 0 : i32
    return %c0_i32, %arg1 : i32, i32
  }
  func.func @transform_3(%arg0: i32, %arg1: i32, %arg2: i32) -> (i32, i32) {
    %c0_i32 = arith.constant 0 : i32
    return %arg0, %arg1 : i32, i32
  }
}

module attributes {stable_mosaic.version = 11 : i64} {
  func.func @_mlp_head_kernel(%arg0: i32, %arg1: memref<8x512xbf16, #tpu.memory_space<vmem>>, %arg2: memref<512x128xbf16, #tpu.memory_space<vmem>>, %arg3: memref<1x128xf32, #tpu.memory_space<vmem>>, %arg4: memref<128x128xf32, #tpu.memory_space<vmem>>, %arg5: memref<1x128xf32, #tpu.memory_space<vmem>>, %arg6: memref<8x128xf32, #tpu.memory_space<vmem>>, %arg7: memref<8x128xf32, #tpu.memory_space<vmem>>) attributes {dimension_semantics = [#tpu.dimension_semantics<arbitrary>], iteration_bounds = array<i64: 4>, scalar_prefetch = 0 : i64, scratch_operands = 1 : i64, tpu.core_type = #tpu.core_type<tc>, window_params = [{transform_indices = @transform_0, window_bounds = array<i64: 8, 512>}, {transform_indices = @transform_1, window_bounds = array<i64: 512, 128>}, {pipeline_mode = #tpu.pipeline_mode<synchronous>, transform_indices = @transform_2, window_bounds = array<i64: 1, 128>}, {pipeline_mode = #tpu.pipeline_mode<synchronous>, transform_indices = @transform_3, window_bounds = array<i64: 128, 128>}, {pipeline_mode = #tpu.pipeline_mode<synchronous>, transform_indices = @transform_4, window_bounds = array<i64: 1, 128>}, {pipeline_mode = #tpu.pipeline_mode<synchronous>, transform_indices = @transform_5, window_bounds = array<i64: 8, 128>}]} {
    %c0_i32 = arith.constant 0 : i32
    %0 = arith.cmpi eq, %arg0, %c0_i32 : i32
    %1 = arith.extui %0 : i1 to i32
    %c0_i32_0 = arith.constant 0 : i32
    %2 = arith.cmpi ne, %1, %c0_i32_0 : i32
    scf.if %2 {
      %cst_9 = arith.constant 0.000000e+00 : f32
      %12 = vector.broadcast %cst_9 : f32 to vector<8x128xf32>
      %c0_10 = arith.constant 0 : index
      %c0_11 = arith.constant 0 : index
      %13 = vector.load %arg7[%c0_10, %c0_11] : memref<8x128xf32, #tpu.memory_space<vmem>>, vector<8x128xf32>
      tpu.vector_store %arg7[%c0_10, %c0_11], %12 {strides = array<i32>} : memref<8x128xf32, #tpu.memory_space<vmem>>, vector<8x128xf32>,
    } else {
    }
    %c0 = arith.constant 0 : index
    %c0_1 = arith.constant 0 : index
    %3 = vector.load %arg7[%c0, %c0_1] : memref<8x128xf32, #tpu.memory_space<vmem>>, vector<8x128xf32>
    %c0_2 = arith.constant 0 : index
    %c0_3 = arith.constant 0 : index
    %4 = vector.load %arg1[%c0_2, %c0_3] : memref<8x512xbf16, #tpu.memory_space<vmem>>, vector<8x512xbf16>
    %c0_4 = arith.constant 0 : index
    %c0_5 = arith.constant 0 : index
    %5 = vector.load %arg2[%c0_4, %c0_5] : memref<512x128xbf16, #tpu.memory_space<vmem>>, vector<512x128xbf16>
    %cst = arith.constant dense<0.000000e+00> : vector<8x128xf32>
    %6 = tpu.matmul %4, %5, %cst {dimension_numbers = #tpu.dot_dimension_numbers<[1], [0], [0], [1], [0, 0, 1, 1], [], []>} : vector<8x512xbf16>, vector<512x128xbf16>, vector<8x128xf32> -> vector<8x128xf32>
    %7 = arith.addf %3, %6 : vector<8x128xf32>
    %c0_6 = arith.constant 0 : index
    %c0_7 = arith.constant 0 : index
    %8 = vector.load %arg7[%c0_6, %c0_7] : memref<8x128xf32, #tpu.memory_space<vmem>>, vector<8x128xf32>
    tpu.vector_store %arg7[%c0_6, %c0_7], %7 {strides = array<i32>} : memref<8x128xf32, #tpu.memory_space<vmem>>, vector<8x128xf32>,
    %c3_i32 = arith.constant 3 : i32
    %9 = arith.cmpi eq, %arg0, %c3_i32 : i32
    %10 = arith.extui %9 : i1 to i32
    %c0_i32_8 = arith.constant 0 : i32
    %11 = arith.cmpi ne, %10, %c0_i32_8 : i32
    scf.if %11 {
      %c0_9 = arith.constant 0 : index
      %c0_10 = arith.constant 0 : index
      %12 = vector.load %arg7[%c0_9, %c0_10] : memref<8x128xf32, #tpu.memory_space<vmem>>, vector<8x128xf32>
      %c0_11 = arith.constant 0 : index
      %c0_12 = arith.constant 0 : index
      %13 = vector.load %arg3[%c0_11, %c0_12] : memref<1x128xf32, #tpu.memory_space<vmem>>, vector<1x128xf32>
      %14 = vector.broadcast %13 : vector<1x128xf32> to vector<8x128xf32>
      %15 = arith.addf %12, %14 : vector<8x128xf32>
      %cst_13 = arith.constant 0.000000e+00 : f32
      %16 = vector.broadcast %cst_13 : f32 to vector<8x128xf32>
      %17 = arith.maximumf %15, %16 : vector<8x128xf32>
      %c0_14 = arith.constant 0 : index
      %c0_15 = arith.constant 0 : index
      %18 = vector.load %arg4[%c0_14, %c0_15] : memref<128x128xf32, #tpu.memory_space<vmem>>, vector<128x128xf32>
      %cst_16 = arith.constant dense<0.000000e+00> : vector<8x128xf32>
      %19 = tpu.matmul %17, %18, %cst_16 {dimension_numbers = #tpu.dot_dimension_numbers<[1], [0], [0], [1], [0, 0, 1, 1], [], []>} : vector<8x128xf32>, vector<128x128xf32>, vector<8x128xf32> -> vector<8x128xf32>
      %c0_17 = arith.constant 0 : index
      %c0_18 = arith.constant 0 : index
      %20 = vector.load %arg5[%c0_17, %c0_18] : memref<1x128xf32, #tpu.memory_space<vmem>>, vector<1x128xf32>
      %21 = vector.broadcast %20 : vector<1x128xf32> to vector<8x128xf32>
      %22 = arith.addf %19, %21 : vector<8x128xf32>
      %cst_19 = arith.constant 0.000000e+00 : f32
      %23 = vector.broadcast %cst_19 : f32 to vector<8x128xf32>
      %24 = arith.subf %23, %22 : vector<8x128xf32>
      %25 = math.exp %24 : vector<8x128xf32>
      %cst_20 = arith.constant 1.000000e+00 : f32
      %26 = vector.broadcast %cst_20 : f32 to vector<8x128xf32>
      %27 = arith.addf %26, %25 : vector<8x128xf32>
      %28 = tpu.reciprocal %27 {approx = true} : vector<8x128xf32> -> vector<8x128xf32>
      %c0_21 = arith.constant 0 : index
      %c0_22 = arith.constant 0 : index
      %29 = vector.load %arg6[%c0_21, %c0_22] : memref<8x128xf32, #tpu.memory_space<vmem>>, vector<8x128xf32>
      tpu.vector_store %arg6[%c0_21, %c0_22], %28 {strides = array<i32>} : memref<8x128xf32, #tpu.memory_space<vmem>>, vector<8x128xf32>,
    } else {
    }
    return
  }
  func.func @transform_0(%arg0: i32) -> (i32, i32) {
    %c0_i32 = arith.constant 0 : i32
    %c0_i32_0 = arith.constant 0 : i32
    return %c0_i32, %arg0 : i32, i32
  }
  func.func @transform_1(%arg0: i32) -> (i32, i32) {
    %c0_i32 = arith.constant 0 : i32
    %c0_i32_0 = arith.constant 0 : i32
    return %arg0, %c0_i32 : i32, i32
  }
  func.func @transform_2(%arg0: i32) -> (i32, i32) {
    %c0_i32 = arith.constant 0 : i32
    %c0_i32_0 = arith.constant 0 : i32
    %c0_i32_1 = arith.constant 0 : i32
    return %c0_i32, %c0_i32_0 : i32, i32
  }
  func.func @transform_3(%arg0: i32) -> (i32, i32) {
    %c0_i32 = arith.constant 0 : i32
    %c0_i32_0 = arith.constant 0 : i32
    %c0_i32_1 = arith.constant 0 : i32
    return %c0_i32, %c0_i32_0 : i32, i32
  }
  func.func @transform_4(%arg0: i32) -> (i32, i32) {
    %c0_i32 = arith.constant 0 : i32
    %c0_i32_0 = arith.constant 0 : i32
    %c0_i32_1 = arith.constant 0 : i32
    return %c0_i32, %c0_i32_0 : i32, i32
  }
  func.func @transform_5(%arg0: i32) -> (i32, i32) {
    %c0_i32 = arith.constant 0 : i32
    %c0_i32_0 = arith.constant 0 : i32
    %c0_i32_1 = arith.constant 0 : i32
    return %c0_i32, %c0_i32_0 : i32, i32
  }
}

</mosaic_0001>

<llo_original>
// kernel: convnet_forward.2
$region0: #{convnet_forward.2}
  #allocation0 [shape = 'u32[]', space=smem, size = 0x4, offset = 0x4, fixed_abs, tag = 'smem constant byte address 0x4 - core index']
  #allocation1 [shape = 'u32[144,128]{1,0:T(1,128)}', space=vmem, size = 0x12000, scoped, tag = 'internal scratch']
  #allocation2 [shape = 'f32[104,128]{1,0:T(8,128)}', space=vmem, size = 0xd000, scoped, tag = 'scratch operand']
  %s0 = inlined_call_operand.vmem [shape: bf16[104,128], index: 0, kind: input, shape index: {}]
  %s1 = inlined_call_operand.vmem [shape: bf16[128,128], index: 1, kind: input, shape index: {}]
  %s2 = inlined_call_operand.vmem [shape: f32[1,128], index: 2, kind: input, shape index: {}]
  %s3 = inlined_call_operand.vmem [shape: bf16[104,128], index: 3, kind: output, shape index: {}]
  %s4 = sld [smem:[#allocation0]]
  $region30: #{convnet_forward.2} parent=0
    _
  %s6 = ssub.s32 1, %s4
  %s7 = scalar_select 0, %s6, %s4
  // Predicated region
  $region2: #{convnet_forward.2} parent=0 // pred_check
    _
  $region3: #{convnet_forward.2} parent=0 // pred_check_branch
    %9 = sbr.rel (0) target = $region5
  $region4: #{convnet_forward.2} parent=0 // pred_region
    _
  $region5: #{convnet_forward.2} parent=0 // pred_fallthru
    _
  // Predicated region
  $region6: #{convnet_forward.2} parent=0 // pred_check
    _
  $region7: #{convnet_forward.2} parent=0 // pred_check_branch
    %11 = sbr.rel (0) target = $region9
  $region8: #{convnet_forward.2} parent=0 // pred_region
    _
  $region9: #{convnet_forward.2} parent=0 // pred_fallthru
    _
  // Predicated region
  $region10: #{convnet_forward.2} parent=0 // pred_check
    _
  $region11: #{convnet_forward.2} parent=0 // pred_check_branch
    %13 = sbr.rel (0) target = $region13
  $region12: #{convnet_forward.2} parent=0 // pred_region
    _
  $region13: #{convnet_forward.2} parent=0 // pred_fallthru
    _
  %p15 = scmp.eq.s32.totalorder 0, 0
  // Predicated region
  $region14: #{convnet_forward.2} parent=0 // pred_check
    %p16 = pneg %p15
  $region15: #{convnet_forward.2} parent=0 // pred_check_branch
    %18 = sbr.rel (%p16) target = $region17
  $region16: #{convnet_forward.2} parent=0 // pred_region
    %19 = vst [vmem:[#allocation2] sm:$0xff] 0.0
    %20 = vst [vmem:[#allocation2 + $0x8] sm:$0xff] 0.0
    %21 = vst [vmem:[#allocation2 + $0x10] sm:$0xff] 0.0
    %22 = vst [vmem:[#allocation2 + $0x18] sm:$0xff] 0.0
    %23 = vst [vmem:[#allocation2 + $0x20] sm:$0xff] 0.0
    %24 = vst [vmem:[#allocation2 + $0x28] sm:$0xff] 0.0
    %25 = vst [vmem:[#allocation2 + $0x30] sm:$0xff] 0.0
    %26 = vst [vmem:[#allocation2 + $0x38] sm:$0xff] 0.0
    %27 = vst [vmem:[#allocation2 + $0x40] sm:$0xff] 0.0
    %28 = vst [vmem:[#allocation2 + $0x48] sm:$0xff] 0.0
    %29 = vst [vmem:[#allocation2 + $0x50] sm:$0xff] 0.0
    %30 = vst [vmem:[#allocation2 + $0x58] sm:$0xff] 0.0
    %31 = vst [vmem:[#allocation2 + $0x60] sm:$0xff] 0.0
  $region17: #{convnet_forward.2} parent=0 // pred_fallthru
    _
  %v32 = vld [vmem:[#allocation2] sm:$0xff]
  %v33 = vld [vmem:[#allocation2 + $0x8] sm:$0xff]
  %v34 = vld [vmem:[#allocation2 + $0x10] sm:$0xff]
  %v35 = vld [vmem:[#allocation2 + $0x18] sm:$0xff]
  %v36 = vld [vmem:[#allocation2 + $0x20] sm:$0xff]
  %v37 = vld [vmem:[#allocation2 + $0x28] sm:$0xff]
  %v38 = vld [vmem:[#allocation2 + $0x30] sm:$0xff]
  %v39 = vld [vmem:[#allocation2 + $0x38] sm:$0xff]
  %v40 = vld [vmem:[#allocation2 + $0x40] sm:$0xff]
  %v41 = vld [vmem:[#allocation2 + $0x48] sm:$0xff]
  %v42 = vld [vmem:[#allocation2 + $0x50] sm:$0xff]
  %v43 = vld [vmem:[#allocation2 + $0x58] sm:$0xff]
  %v44 = vld [vmem:[#allocation2 + $0x60] sm:$0xff]
  %v45 = vld [vmem:[%s0] sm:$0xf]
  %v46 = vld [vmem:[%s0 + $0x4] sm:$0xf]
  %v47 = vld [vmem:[%s0 + $0x8] sm:$0xf]
  %v48 = vld [vmem:[%s0 + $0xc] sm:$0xf]
  %v49 = vld [vmem:[%s0 + $0x10] sm:$0xf]
  %v50 = vld [vmem:[%s0 + $0x14] sm:$0xf]
  %v51 = vld [vmem:[%s0 + $0x18] sm:$0xf]
  %v52 = vld [vmem:[%s0 + $0x1c] sm:$0xf]
  %v53 = vld [vmem:[%s0 + $0x20] sm:$0xf]
  %v54 = vld [vmem:[%s0 + $0x24] sm:$0xf]
  %v55 = vld [vmem:[%s0 + $0x28] sm:$0xf]
  %v56 = vld [vmem:[%s0 + $0x2c] sm:$0xf]
  %v57 = vld [vmem:[%s0 + $0x30] sm:$0xf]
  %v58 = vld [vmem:[%s1] sm:$0xf]
  %v59 = vld [vmem:[%s1 + $0x4] sm:$0xf]
  %v60 = vld [vmem:[%s1 + $0x8] sm:$0xf]
  %v61 = vld [vmem:[%s1 + $0xc] sm:$0xf]
  %v62 = vld [vmem:[%s1 + $0x10] sm:$0xf]
  %v63 = vld [vmem:[%s1 + $0x14] sm:$0xf]
  %v64 = vld [vmem:[%s1 + $0x18] sm:$0xf]
  %v65 = vld [vmem:[%s1 + $0x1c] sm:$0xf]
  %v66 = vld [vmem:[%s1 + $0x20] sm:$0xf]
  %v67 = vld [vmem:[%s1 + $0x24] sm:$0xf]
  %v68 = vld [vmem:[%s1 + $0x28] sm:$0xf]
  %v69 = vld [vmem:[%s1 + $0x2c] sm:$0xf]
  %v70 = vld [vmem:[%s1 + $0x30] sm:$0xf]
  %v71 = vld [vmem:[%s1 + $0x34] sm:$0xf]
  %v72 = vld [vmem:[%s1 + $0x38] sm:$0xf]
  %v73 = vld [vmem:[%s1 + $0x3c] sm:$0xf]
  %v87 = vunpack.c.l.b16 %v45
  %v88 = vunpack.c.l.b16 %v46
  %v89 = vunpack.c.l.b16 %v47
  %v90 = vunpack.c.l.b16 %v48
  %v91 = vunpack.c.l.b16 %v49
  %v92 = vunpack.c.l.b16 %v50
  %v93 = vunpack.c.l.b16 %v51
  %v94 = vunpack.c.l.b16 %v52
  %v95 = vunpack.c.l.b16 %v53
  %v96 = vunpack.c.l.b16 %v54
  %v97 = vunpack.c.l.b16 %v55
  %v98 = vunpack.c.l.b16 %v56
  %v99 = vunpack.c.l.b16 %v57
  %v100 = vpack.c.b16 %v88, %v87
  %v101 = vpack.c.b16 %v90, %v89
  %v102 = vpack.c.b16 %v92, %v91
  %v103 = vpack.c.b16 %v94, %v93
  %v104 = vpack.c.b16 %v96, %v95
  %v105 = vpack.c.b16 %v98, %v97
  %v106 = vpack.c.b16 %v99, %v99
  %v130 = vunpack.c.l.b16 %v58
  %v131 = vunpack.c.l.b16 %v59
  %v132 = vunpack.c.l.b16 %v60
  %v133 = vunpack.c.l.b16 %v61
  %v134 = vunpack.c.l.b16 %v62
  %v135 = vunpack.c.l.b16 %v63
  %v136 = vunpack.c.l.b16 %v64
  %v137 = vunpack.c.l.b16 %v65
  %v138 = vunpack.c.l.b16 %v66
  %v139 = vunpack.c.l.b16 %v67
  %v140 = vunpack.c.l.b16 %v68
  %v141 = vunpack.c.l.b16 %v69
  %v142 = vunpack.c.l.b16 %v70
  %v143 = vunpack.c.l.b16 %v71
  %v144 = vunpack.c.l.b16 %v72
  %v145 = vunpack.c.l.b16 %v73
  %v146 = vpack.c.b16 %v131, %v130
  %v147 = vpack.c.b16 %v133, %v132
  %v148 = vpack.c.b16 %v135, %v134
  %v149 = vpack.c.b16 %v137, %v136
  %v150 = vpack.c.b16 %v139, %v138
  %v151 = vpack.c.b16 %v141, %v140
  %v152 = vpack.c.b16 %v143, %v142
  %v153 = vpack.c.b16 %v145, %v144
  %162 = vmatprep.subr.bf16.mxu0 0
  %163 = vmatpush1.bf16.msra.mxu0 %v146
  %164 = vmatprep.subr.bf16.mxu0 0
  %165 = vmatpush1.bf16.msra.mxu0 %v147
  %166 = vmatprep.subr.bf16.mxu0 0
  %167 = vmatpush1.bf16.msra.mxu0 %v148
  %168 = vmatprep.subr.bf16.mxu0 0
  %169 = vmatpush1.bf16.msra.mxu0 %v149
  %170 = vmatprep.subr.bf16.mxu0 0
  %171 = vmatpush1.bf16.msra.mxu0 %v150
  %172 = vmatprep.subr.bf16.mxu0 0
  %173 = vmatpush1.bf16.msra.mxu0 %v151
  %174 = vmatprep.subr.bf16.mxu0 0
  %175 = vmatpush1.bf16.msra.mxu0 %v152
  %176 = vmatprep.subr.bf16.mxu0 0
  %177 = vmatpush1.bf16.msra.mxu0 %v153
  %178 = vmatprep.subr.bf16.mxu0 0
  %179 = vmatpush1.bf16.msra.mxu0 0
  %180 = vmatprep.subr.bf16.mxu0 0
  %181 = vmatpush1.bf16.msra.mxu0 0
  %182 = vmatprep.subr.bf16.mxu0 0
  %183 = vmatpush1.bf16.msra.mxu0 0
  %184 = vmatprep.subr.bf16.mxu0 0
  %185 = vmatpush1.bf16.msra.mxu0 0
  %186 = vmatprep.subr.bf16.mxu0 0
  %187 = vmatpush1.bf16.msra.mxu0 0
  %188 = vmatprep.subr.bf16.mxu0 0
  %189 = vmatpush1.bf16.msra.mxu0 0
  %190 = vmatprep.subr.bf16.mxu0 0
  %191 = vmatpush1.bf16.msra.mxu0 0
  %192 = vmatprep.subr.bf16.mxu0 0
  %193 = vmatpush1.bf16.msra.mxu0 0
  %194 = vmatprep.mubr.bf16.mxu0 0
  %195 = vmatmul.mubr.bf16.gmra.mrb[0].mxu0 %v100
  %v196 = vpop.f32.mrb[0].mxu0
  %v197 = vadd.f32 0.0, %v196
  %v198 = vpop.f32.mrb[0].mxu0
  %v199 = vpop.f32.mrb[0].mxu0
  %v200 = vadd.f32 0.0, %v199
  %v201 = vpop.f32.mrb[0].mxu0
  %202 = vmatprep.mubr.bf16.mxu0 0
  %203 = vmatmul.mubr.bf16.gmra.mrb[0].mxu0 %v101
  %v204 = vpop.f32.mrb[0].mxu0
  %v205 = vadd.f32 0.0, %v204
  %v206 = vpop.f32.mrb[0].mxu0
  %v207 = vpop.f32.mrb[0].mxu0
  %v208 = vadd.f32 0.0, %v207
  %v209 = vpop.f32.mrb[0].mxu0
  %210 = vmatprep.mubr.bf16.mxu0 0
  %211 = vmatmul.mubr.bf16.gmra.mrb[0].mxu0 %v102
  %v212 = vpop.f32.mrb[0].mxu0
  %v213 = vadd.f32 0.0, %v212
  %v214 = vpop.f32.mrb[0].mxu0
  %v215 = vpop.f32.mrb[0].mxu0
  %v216 = vadd.f32 0.0, %v215
  %v217 = vpop.f32.mrb[0].mxu0
  %218 = vmatprep.mubr.bf16.mxu0 0
  %219 = vmatmul.mubr.bf16.gmra.mrb[0].mxu0 %v103
  %v220 = vpop.f32.mrb[0].mxu0
  %v221 = vadd.f32 0.0, %v220
  %v222 = vpop.f32.mrb[0].mxu0
  %v223 = vpop.f32.mrb[0].mxu0
  %v224 = vadd.f32 0.0, %v223
  %v225 = vpop.f32.mrb[0].mxu0
  %226 = vmatprep.mubr.bf16.mxu0 0
  %227 = vmatmul.mubr.bf16.gmra.mrb[0].mxu0 %v104
  %v228 = vpop.f32.mrb[0].mxu0
  %v229 = vadd.f32 0.0, %v228
  %v230 = vpop.f32.mrb[0].mxu0
  %v231 = vpop.f32.mrb[0].mxu0
  %v232 = vadd.f32 0.0, %v231
  %v233 = vpop.f32.mrb[0].mxu0
  %234 = vmatprep.mubr.bf16.mxu0 0
  %235 = vmatmul.mubr.bf16.gmra.mrb[0].mxu0 %v105
  %v236 = vpop.f32.mrb[0].mxu0
  %v237 = vadd.f32 0.0, %v236
  %v238 = vpop.f32.mrb[0].mxu0
  %v239 = vpop.f32.mrb[0].mxu0
  %v240 = vadd.f32 0.0, %v239
  %v241 = vpop.f32.mrb[0].mxu0
  %242 = vmatprep.mubr.bf16.mxu0 0
  %243 = vmatmul.mubr.bf16.gmra.mrb[0].mxu0 %v106
  %v244 = vpop.f32.mrb[0].mxu0
  %v245 = vadd.f32 0.0, %v244
  %v246 = vpop.f32.mrb[0].mxu0
  %v247 = vpop.f32.mrb[0].mxu0
  %v248 = vpop.f32.mrb[0].mxu0
  %249 = vdwg.mxu0
  %v250 = vadd.f32 %v32, %v197
  %v251 = vadd.f32 %v33, %v200
  %v252 = vadd.f32 %v34, %v205
  %v253 = vadd.f32 %v35, %v208
  %v254 = vadd.f32 %v36, %v213
  %v255 = vadd.f32 %v37, %v216
  %v256 = vadd.f32 %v38, %v221
  %v257 = vadd.f32 %v39, %v224
  %v258 = vadd.f32 %v40, %v229
  %v259 = vadd.f32 %v41, %v232
  %v260 = vadd.f32 %v42, %v237
  %v261 = vadd.f32 %v43, %v240
  %v262 = vadd.f32 %v44, %v245
  %263 = vst [vmem:[#allocation2] sm:$0xff] %v250
  %264 = vst [vmem:[#allocation2 + $0x8] sm:$0xff] %v251
  %265 = vst [vmem:[#allocation2 + $0x10] sm:$0xff] %v252
  %266 = vst [vmem:[#allocation2 + $0x18] sm:$0xff] %v253
  %267 = vst [vmem:[#allocation2 + $0x20] sm:$0xff] %v254
  %268 = vst [vmem:[#allocation2 + $0x28] sm:$0xff] %v255
  %269 = vst [vmem:[#allocation2 + $0x30] sm:$0xff] %v256
  %270 = vst [vmem:[#allocation2 + $0x38] sm:$0xff] %v257
  %271 = vst [vmem:[#allocation2 + $0x40] sm:$0xff] %v258
  %272 = vst [vmem:[#allocation2 + $0x48] sm:$0xff] %v259
  %273 = vst [vmem:[#allocation2 + $0x50] sm:$0xff] %v260
  %274 = vst [vmem:[#allocation2 + $0x58] sm:$0xff] %v261
  %275 = vst [vmem:[#allocation2 + $0x60] sm:$0xff] %v262
  // Predicated region
  $region18: #{convnet_forward.2} parent=0 // pred_check
    %p276 = pneg %p15
  $region19: #{convnet_forward.2} parent=0 // pred_check_branch
    %278 = sbr.rel (%p276) target = $region21
  $region20: #{convnet_forward.2} parent=0 // pred_region
    %v279 = vld [vmem:[#allocation2] sm:$0xff]
    %v280 = vld [vmem:[#allocation2 + $0x8] sm:$0xff]
    %v281 = vld [vmem:[#allocation2 + $0x10] sm:$0xff]
    %v282 = vld [vmem:[#allocation2 + $0x18] sm:$0xff]
    %v283 = vld [vmem:[#allocation2 + $0x20] sm:$0xff]
    %v284 = vld [vmem:[#allocation2 + $0x28] sm:$0xff]
    %v285 = vld [vmem:[#allocation2 + $0x30] sm:$0xff]
    %v286 = vld [vmem:[#allocation2 + $0x38] sm:$0xff]
    %v287 = vld [vmem:[#allocation2 + $0x40] sm:$0xff]
    %v288 = vld [vmem:[#allocation2 + $0x48] sm:$0xff]
    %v289 = vld [vmem:[#allocation2 + $0x50] sm:$0xff]
    %v290 = vld [vmem:[#allocation2 + $0x58] sm:$0xff]
    %v291 = vld [vmem:[#allocation2 + $0x60] sm:$0xff]
    %v292 = vld [vmem:[%s2] sm:$0x1]
    %v294 = vlaneseq
    %v295 = vshrl.u32 %v294, 7
    %v296 = vsub.s32 0, %v295
    %v297 = vrot.slane %v292, %v296
    %v299 = vadd.f32 %v279, %v297
    %v300 = vadd.f32 %v280, %v297
    %v301 = vadd.f32 %v281, %v297
    %v302 = vadd.f32 %v282, %v297
    %v303 = vadd.f32 %v283, %v297
    %v304 = vadd.f32 %v284, %v297
    %v305 = vadd.f32 %v285, %v297
    %v306 = vadd.f32 %v286, %v297
    %v307 = vadd.f32 %v287, %v297
    %v308 = vadd.f32 %v288, %v297
    %v309 = vadd.f32 %v289, %v297
    %v310 = vadd.f32 %v290, %v297
    %v311 = vadd.f32 %v291, %v297
    %v312 = vmax.f32 %v299, 0.0
    %v313 = vmax.f32 %v300, 0.0
    %v314 = vmax.f32 %v301, 0.0
    %v315 = vmax.f32 %v302, 0.0
    %v316 = vmax.f32 %v303, 0.0
    %v317 = vmax.f32 %v304, 0.0
    %v318 = vmax.f32 %v305, 0.0
    %v319 = vmax.f32 %v306, 0.0
    %v320 = vmax.f32 %v307, 0.0
    %v321 = vmax.f32 %v308, 0.0
    %v322 = vmax.f32 %v309, 0.0
    %v323 = vmax.f32 %v310, 0.0
    %v324 = vmax.f32 %v311, 0.0
    %v325 = vpack.c.bf16 %v313, %v312
    %v326 = vpack.c.bf16 %v315, %v314
    %v327 = vpack.c.bf16 %v317, %v316
    %v328 = vpack.c.bf16 %v319, %v318
    %v329 = vpack.c.bf16 %v321, %v320
    %v330 = vpack.c.bf16 %v323, %v322
    %v331 = vpack.c.bf16 %v324, %v324
    %v339 = vunpack.c.l.b16 %v325
    %v340 = vunpack.c.h.b16 %v325
    %v341 = vunpack.c.l.b16 %v326
    %v342 = vunpack.c.h.b16 %v326
    %v343 = vunpack.c.l.b16 %v327
    %v344 = vunpack.c.h.b16 %v327
    %v345 = vunpack.c.l.b16 %v328
    %v346 = vunpack.c.h.b16 %v328
    %v347 = vunpack.c.l.b16 %v329
    %v348 = vunpack.c.h.b16 %v329
    %v349 = vunpack.c.l.b16 %v330
    %v350 = vunpack.c.h.b16 %v330
    %v351 = vunpack.c.l.b16 %v331
    %v352 = vpack.c.b16 %v339, %v339
    %v353 = vpack.c.b16 %v340, %v340
    %v354 = vpack.c.b16 %v341, %v341
    %v355 = vpack.c.b16 %v342, %v342
    %v356 = vpack.c.b16 %v343, %v343
    %v357 = vpack.c.b16 %v344, %v344
    %v358 = vpack.c.b16 %v345, %v345
    %v359 = vpack.c.b16 %v346, %v346
    %v360 = vpack.c.b16 %v347, %v347
    %v361 = vpack.c.b16 %v348, %v348
    %v362 = vpack.c.b16 %v349, %v349
    %v363 = vpack.c.b16 %v350, %v350
    %v364 = vpack.c.b16 %v351, %v351
    %378 = vst [vmem:[%s3] sm:$0xf] %v352
    %379 = vst [vmem:[%s3 + $0x4] sm:$0xf] %v353
    %380 = vst [vmem:[%s3 + $0x8] sm:$0xf] %v354
    %381 = vst [vmem:[%s3 + $0xc] sm:$0xf] %v355
    %382 = vst [vmem:[%s3 + $0x10] sm:$0xf] %v356
    %383 = vst [vmem:[%s3 + $0x14] sm:$0xf] %v357
    %384 = vst [vmem:[%s3 + $0x18] sm:$0xf] %v358
    %385 = vst [vmem:[%s3 + $0x1c] sm:$0xf] %v359
    %386 = vst [vmem:[%s3 + $0x20] sm:$0xf] %v360
    %387 = vst [vmem:[%s3 + $0x24] sm:$0xf] %v361
    %388 = vst [vmem:[%s3 + $0x28] sm:$0xf] %v362
    %389 = vst [vmem:[%s3 + $0x2c] sm:$0xf] %v363
    %390 = vst [vmem:[%s3 + $0x30] sm:$0xf] %v364
  $region21: #{convnet_forward.2} parent=0 // pred_fallthru
    _
  // Predicated region
  $region22: #{convnet_forward.2} parent=0 // pred_check
    _
  $region23: #{convnet_forward.2} parent=0 // pred_check_branch
    %392 = sbr.rel (0) target = $region25
  $region24: #{convnet_forward.2} parent=0 // pred_region
    _
  $region25: #{convnet_forward.2} parent=0 // pred_fallthru
    _
  // Predicated region
  $region26: #{convnet_forward.2} parent=0 // pred_check
    _
  $region27: #{convnet_forward.2} parent=0 // pred_check_branch
    %394 = sbr.rel (0) target = $region29
  $region28: #{convnet_forward.2} parent=0 // pred_region
    _
  $region29: #{convnet_forward.2} parent=0 // pred_fallthru
    _

// kernel: convnet_forward.3
$region0: #{convnet_forward.3}
  #allocation0 [shape = 'u32[]', space=smem, size = 0x4, offset = 0x4, fixed_abs, tag = 'smem constant byte address 0x4 - core index']
  #allocation1 [shape = 'u32[144,128]{1,0:T(1,128)}', space=vmem, size = 0x12000, scoped, tag = 'internal scratch']
  #allocation2 [shape = 'f32[8,128]{1,0:T(8,128)}', space=vmem, size = 0x1000, scoped, tag = 'scratch operand']
  %s0 = inlined_call_operand.vmem [shape: bf16[8,2048], index: 0, kind: input, shape index: {}]
  %s1 = inlined_call_operand.vmem [shape: bf16[2048,128], index: 1, kind: input, shape index: {}]
  %s2 = inlined_call_operand.vmem [shape: f32[1,128], index: 2, kind: input, shape index: {}]
  %s3 = inlined_call_operand.vmem [shape: f32[128,128], index: 3, kind: input, shape index: {}]
  %s4 = inlined_call_operand.vmem [shape: f32[1,128], index: 4, kind: input, shape index: {}]
  %s5 = inlined_call_operand.vmem [shape: f32[8,128], index: 5, kind: output, shape index: {}]
  %s6 = sld [smem:[#allocation0]]
  $region61: #{convnet_forward.3} parent=0
    _
  %s8 = ssub.s32 1, %s6
  %s9 = scalar_select 0, %s8, %s6
  loop: start=0, step=1, limit=6
  $region2: #{convnet_forward.3} parent=0 // loop_pre_header
    _
  $region3: #{convnet_forward.3} parent=0 // loop_header
    %s11 = sphi 0, %s15
    %p12 = scmp.ge.s32.totalorder %s11, 6
    %s21 = sphi 0, %s23
    %s24 = sphi 0, %s21
    %s25 = sphi 0, %s24
    %s41 = sphi 0, %s25
    %s47 = sphi 0, %s49
    %s50 = sphi 0, %s47
    %s51 = sphi 0, %s50
    %s67 = sphi 0, %s51
    %s71 = sphi 0, %s71
    %s73 = sphi 0, %s71
    %s74 = sphi 0, %s73
    %s88 = sphi 0, %s74
    %s92 = sphi 0, %s92
    %s94 = sphi 0, %s92
    %s95 = sphi 0, %s94
    %s109 = sphi 0, %s95
    %s113 = sphi 0, %s113
    %s115 = sphi 0, %s113
    %s116 = sphi 0, %s115
    %s130 = sphi 0, %s116
    %s134 = sphi 0, %s134
    %s136 = sphi 0, %s134
    %s137 = sphi 0, %s136
    %s151 = sphi 0, %s137
  $region4: #{convnet_forward.3} parent=0 // loop_header_branch
    %14 = sbr.rel (%p12) target = $region8
  $region5: #{convnet_forward.3} parent=0 // loop_body
    %s16 = ssub.s32 %s11, 1
    %s17 = ssub.s32 %s11, 2
    %s18 = sadd.s32 %s11, 1
    %s19 = ssub.s32 %s11, %s18
    %p20 = scmp.eq.s32.totalorder %s19, 0
    %s22 = sadd.s32 %s21, 1
    %s23 = scalar_select %p20, %s21, %s22
    %p26 = pneg %p20
    %p27 = scmp.eq.s32.totalorder %s11, 3
    %p28 = por %p26, %p27
    %p29 = scmp.ne.s32.totalorder %s21, %s24
    %p30 = scmp.eq.s32.totalorder %s11, 0
    %p31 = por %p29, %p30
    %p32 = scmp.ne.s32.totalorder %s21, %s24
    %p33 = scmp.eq.s32.totalorder %s16, 3
    %p34 = por %p32, %p33
    %p35 = scmp.ne.s32.totalorder %s24, %s25
    %p36 = scmp.eq.s32.totalorder %s16, 0
    %p37 = por %p35, %p36
    %p38 = scmp.ne.s32.totalorder %s24, %s25
    %p39 = scmp.eq.s32.totalorder %s17, 3
    %p40 = por %p38, %p39
    %p42 = scmp.ne.s32.totalorder %s25, %s41
    %p43 = scmp.eq.s32.totalorder %s17, 0
    %p44 = por %p42, %p43
    %s45 = ssub.s32 %s11, %s18
    %p46 = scmp.eq.s32.totalorder %s45, 0
    %s48 = sadd.s32 %s47, 1
    %s49 = scalar_select %p46, %s47, %s48
    %p52 = pneg %p46
    %p53 = scmp.eq.s32.totalorder %s11, 3
    %p54 = por %p52, %p53
    %p55 = scmp.ne.s32.totalorder %s47, %s50
    %p56 = scmp.eq.s32.totalorder %s11, 0
    %p57 = por %p55, %p56
    %p58 = scmp.ne.s32.totalorder %s47, %s50
    %p59 = scmp.eq.s32.totalorder %s16, 3
    %p60 = por %p58, %p59
    %p61 = scmp.ne.s32.totalorder %s50, %s51
    %p62 = scmp.eq.s32.totalorder %s16, 0
    %p63 = por %p61, %p62
    %p64 = scmp.ne.s32.totalorder %s50, %s51
    %p65 = scmp.eq.s32.totalorder %s17, 3
    %p66 = por %p64, %p65
    %p68 = scmp.ne.s32.totalorder %s51, %s67
    %p69 = scmp.eq.s32.totalorder %s17, 0
    %p70 = por %p68, %p69
    %s72 = sadd.s32 %s71, 1
    %p75 = scmp.eq.s32.totalorder %s11, 3
    %p76 = scmp.ne.s32.totalorder %s71, %s73
    %p77 = scmp.eq.s32.totalorder %s11, 0
    %p78 = por %p76, %p77
    %p79 = scmp.ne.s32.totalorder %s71, %s73
    %p80 = scmp.eq.s32.totalorder %s16, 3
    %p81 = por %p79, %p80
    %p82 = scmp.ne.s32.totalorder %s73, %s74
    %p83 = scmp.eq.s32.totalorder %s16, 0
    %p84 = por %p82, %p83
    %p85 = scmp.ne.s32.totalorder %s73, %s74
    %p86 = scmp.eq.s32.totalorder %s17, 3
    %p87 = por %p85, %p86
    %p89 = scmp.ne.s32.totalorder %s74, %s88
    %p90 = scmp.eq.s32.totalorder %s17, 0
    %p91 = por %p89, %p90
    %s93 = sadd.s32 %s92, 1
    %p96 = scmp.eq.s32.totalorder %s11, 3
    %p97 = scmp.ne.s32.totalorder %s92, %s94
    %p98 = scmp.eq.s32.totalorder %s11, 0
    %p99 = por %p97, %p98
    %p100 = scmp.ne.s32.totalorder %s92, %s94
    %p101 = scmp.eq.s32.totalorder %s16, 3
    %p102 = por %p100, %p101
    %p103 = scmp.ne.s32.totalorder %s94, %s95
    %p104 = scmp.eq.s32.totalorder %s16, 0
    %p105 = por %p103, %p104
    %p106 = scmp.ne.s32.totalorder %s94, %s95
    %p107 = scmp.eq.s32.totalorder %s17, 3
    %p108 = por %p106, %p107
    %p110 = scmp.ne.s32.totalorder %s95, %s109
    %p111 = scmp.eq.s32.totalorder %s17, 0
    %p112 = por %p110, %p111
    %s114 = sadd.s32 %s113, 1
    %p117 = scmp.eq.s32.totalorder %s11, 3
    %p118 = scmp.ne.s32.totalorder %s113, %s115
    %p119 = scmp.eq.s32.totalorder %s11, 0
    %p120 = por %p118, %p119
    %p121 = scmp.ne.s32.totalorder %s113, %s115
    %p122 = scmp.eq.s32.totalorder %s16, 3
    %p123 = por %p121, %p122
    %p124 = scmp.ne.s32.totalorder %s115, %s116
    %p125 = scmp.eq.s32.totalorder %s16, 0
    %p126 = por %p124, %p125
    %p127 = scmp.ne.s32.totalorder %s115, %s116
    %p128 = scmp.eq.s32.totalorder %s17, 3
    %p129 = por %p127, %p128
    %p131 = scmp.ne.s32.totalorder %s116, %s130
    %p132 = scmp.eq.s32.totalorder %s17, 0
    %p133 = por %p131, %p132
    %s135 = sadd.s32 %s134, 1
    %p138 = scmp.eq.s32.totalorder %s11, 3
    %p139 = scmp.ne.s32.totalorder %s134, %s136
    %p140 = scmp.eq.s32.totalorder %s11, 0
    %p141 = por %p139, %p140
    %p142 = scmp.ne.s32.totalorder %s134, %s136
    %p143 = scmp.eq.s32.totalorder %s16, 3
    %p144 = por %p142, %p143
    %p145 = scmp.ne.s32.totalorder %s136, %s137
    %p146 = scmp.eq.s32.totalorder %s16, 0
    %p147 = por %p145, %p146
    %p148 = scmp.ne.s32.totalorder %s136, %s137
    %p149 = scmp.eq.s32.totalorder %s17, 3
    %p150 = por %p148, %p149
    %p152 = scmp.ne.s32.totalorder %s137, %s151
    %p153 = scmp.eq.s32.totalorder %s17, 0
    %p154 = por %p152, %p153
    %p155 = scmp.le.s32.totalorder 1, %s11
    %p156 = scmp.lt.s32.totalorder %s11, 5
    %p157 = pnand %p155, %p156
    %p158 = pneg %p157
    // Predicated region
    $region9: #{convnet_forward.3} parent=5 // pred_check
      _
    $region10: #{convnet_forward.3} parent=5 // pred_check_branch
      %160 = sbr.rel (%p157) target = $region12
    $region11: #{convnet_forward.3} parent=5 // pred_region
      %s161 = ssub.s32 %s11, 1
      // Predicated region
      $region13: #{convnet_forward.3} parent=11 // pred_check
        %p162 = pneg %p84
      $region14: #{convnet_forward.3} parent=11 // pred_check_branch
        %164 = sbr.rel (%p162) target = $region16
      $region15: #{convnet_forward.3} parent=11 // pred_region
        _
      $region16: #{convnet_forward.3} parent=11 // pred_fallthru
        _
      // Predicated region
      $region17: #{convnet_forward.3} parent=11 // pred_check
        %p165 = pneg %p105
      $region18: #{convnet_forward.3} parent=11 // pred_check_branch
        %167 = sbr.rel (%p165) target = $region20
      $region19: #{convnet_forward.3} parent=11 // pred_region
        _
      $region20: #{convnet_forward.3} parent=11 // pred_fallthru
        _
      // Predicated region
      $region21: #{convnet_forward.3} parent=11 // pred_check
        %p168 = pneg %p126
      $region22: #{convnet_forward.3} parent=11 // pred_check_branch
        %170 = sbr.rel (%p168) target = $region24
      $region23: #{convnet_forward.3} parent=11 // pred_region
        _
      $region24: #{convnet_forward.3} parent=11 // pred_fallthru
        _
    $region12: #{convnet_forward.3} parent=5 // pred_fallthru
      _
    %p171 = scmp.lt.s32.totalorder %s11, 4
    // Predicated region
    $region25: #{convnet_forward.3} parent=5 // pred_check
      %p172 = pneg %p171
    $region26: #{convnet_forward.3} parent=5 // pred_check_branch
      %174 = sbr.rel (%p172) target = $region28
    $region27: #{convnet_forward.3} parent=5 // pred_region
      // Predicated region
      $region29: #{convnet_forward.3} parent=27 // pred_check
        %p175 = pneg %p31
      $region30: #{convnet_forward.3} parent=27 // pred_check_branch
        %177 = sbr.rel (%p175) target = $region32
      $region31: #{convnet_forward.3} parent=27 // pred_region
        %s178 = smul.u32 4, %s11
        %p179 = scmp.lt.s32.totalorder %s178, 15
        %s180 = scalar_select %p179, %s178, 15
        %s181 = smul.addr %s180, 4
        %s182 = scalar_lea.vmem %s0, %s181
        %s183 = smul.u32 4, %s11
      $region32: #{convnet_forward.3} parent=27 // pred_fallthru
        _
      // Predicated region
      $region33: #{convnet_forward.3} parent=27 // pred_check
        %p184 = pneg %p57
      $region34: #{convnet_forward.3} parent=27 // pred_check_branch
        %186 = sbr.rel (%p184) target = $region36
      $region35: #{convnet_forward.3} parent=27 // pred_region
        %s187 = smul.u32 64, %s11
        %p188 = scmp.lt.s32.totalorder %s187, 255
        %s189 = scalar_select %p188, %s187, 255
        %s190 = smul.addr %s189, 4
        %s191 = scalar_lea.vmem %s1, %s190
        %s192 = smul.u32 64, %s11
      $region36: #{convnet_forward.3} parent=27 // pred_fallthru
        _
    $region28: #{convnet_forward.3} parent=5 // pred_fallthru
      _
    %p193 = scmp.le.s32.totalorder 1, %s11
    %p194 = scmp.lt.s32.totalorder %s11, 5
    %p195 = pnand %p193, %p194
    %p196 = pneg %p195
    // Predicated region
    $region37: #{convnet_forward.3} parent=5 // pred_check
      _
    $region38: #{convnet_forward.3} parent=5 // pred_check_branch
      %198 = sbr.rel (%p195) target = $region40
    $region39: #{convnet_forward.3} parent=5 // pred_region
      %s199 = ssub.s32 %s11, 1
      %s200 = smul.u32 4, %s16
      %p201 = scmp.lt.s32.totalorder %s200, 15
      %s202 = scalar_select %p201, %s200, 15
      %s203 = smul.addr %s202, 4
      %s204 = scalar_lea.vmem %s0, %s203
      %p205 = pneg %p37
      %p206 = pneg %p34
      %s207 = smul.u32 64, %s16
      %p208 = scmp.lt.s32.totalorder %s207, 255
      %s209 = scalar_select %p208, %s207, 255
      %s210 = smul.addr %s209, 4
      %s211 = scalar_lea.vmem %s1, %s210
      %p212 = pneg %p63
      %p213 = pneg %p60
      %p214 = pneg %p84
      %p215 = pneg %p81
      %p216 = pneg %p105
      %p217 = pneg %p102
      %p218 = pneg %p126
      %p219 = pneg %p123
      %p220 = pneg %p147
      %p221 = pneg %p144
      %s222 = smul.u32 4, %s16
      %p223 = scmp.lt.s32.totalorder %s222, 15
      %s224 = scalar_select %p223, %s222, 15
      %s225 = smul.addr %s224, 4
      %s226 = scalar_lea.vmem %s0, %s225
      %s227 = smul.u32 4, %s16
      %s228 = smul.u32 64, %s16
      %p229 = scmp.lt.s32.totalorder %s228, 255
      %s230 = scalar_select %p229, %s228, 255
      %s231 = smul.addr %s230, 4
      %s232 = scalar_lea.vmem %s1, %s231
      %s233 = smul.u32 64, %s16
      %p235 = scmp.eq.s32.totalorder %s16, 0
      // Predicated region
      $region41: #{convnet_forward.3} parent=39 // pred_check
        %p236 = pneg %p235
      $region42: #{convnet_forward.3} parent=39 // pred_check_branch
        %238 = sbr.rel (%p236) target = $region44
      $region43: #{convnet_forward.3} parent=39 // pred_region
        %239 = vst [vmem:[#allocation2] sm:$0xff] 0.0
      $region44: #{convnet_forward.3} parent=39 // pred_fallthru
        _
      %v240 = vld [vmem:[#allocation2] sm:$0xff]
      %v241 = vld [vmem:[%s226] sm:$0xff]
      %v242 = vld [vmem:[%s226 + $0x8] sm:$0xff]
      %v243 = vld [vmem:[%s232] sm:$0xf]
      %v244 = vld [vmem:[%s232 + $0x4] sm:$0xf]
      %v245 = vld [vmem:[%s232 + $0x8] sm:$0xf]
      %v246 = vld [vmem:[%s232 + $0xc] sm:$0xf]
      %v247 = vld [vmem:[%s232 + $0x10] sm:$0xf]
      %v248 = vld [vmem:[%s232 + $0x14] sm:$0xf]
      %v249 = vld [vmem:[%s232 + $0x18] sm:$0xf]
      %v250 = vld [vmem:[%s232 + $0x1c] sm:$0xf]
      %v251 = vld [vmem:[%s232 + $0x20] sm:$0xf]
      %v252 = vld [vmem:[%s232 + $0x24] sm:$0xf]
      %v253 = vld [vmem:[%s232 + $0x28] sm:$0xf]
      %v254 = vld [vmem:[%s232 + $0x2c] sm:$0xf]
      %v255 = vld [vmem:[%s232 + $0x30] sm:$0xf]
      %v256 = vld [vmem:[%s232 + $0x34] sm:$0xf]
      %v257 = vld [vmem:[%s232 + $0x38] sm:$0xf]
      %v258 = vld [vmem:[%s232 + $0x3c] sm:$0xf]
      %v259 = vld [vmem:[%s232 + $0x40] sm:$0xf]
      %v260 = vld [vmem:[%s232 + $0x44] sm:$0xf]
      %v261 = vld [vmem:[%s232 + $0x48] sm:$0xf]
      %v262 = vld [vmem:[%s232 + $0x4c] sm:$0xf]
      %v263 = vld [vmem:[%s232 + $0x50] sm:$0xf]
      %v264 = vld [vmem:[%s232 + $0x54] sm:$0xf]
      %v265 = vld [vmem:[%s232 + $0x58] sm:$0xf]
      %v266 = vld [vmem:[%s232 + $0x5c] sm:$0xf]
      %v267 = vld [vmem:[%s232 + $0x60] sm:$0xf]
      %v268 = vld [vmem:[%s232 + $0x64] sm:$0xf]
      %v269 = vld [vmem:[%s232 + $0x68] sm:$0xf]
      %v270 = vld [vmem:[%s232 + $0x6c] sm:$0xf]
      %v271 = vld [vmem:[%s232 + $0x70] sm:$0xf]
      %v272 = vld [vmem:[%s232 + $0x74] sm:$0xf]
      %v273 = vld [vmem:[%s232 + $0x78] sm:$0xf]
      %v274 = vld [vmem:[%s232 + $0x7c] sm:$0xf]
      %v275 = vld [vmem:[%s232 + $0x80] sm:$0xf]
      %v276 = vld [vmem:[%s232 + $0x84] sm:$0xf]
      %v277 = vld [vmem:[%s232 + $0x88] sm:$0xf]
      %v278 = vld [vmem:[%s232 + $0x8c] sm:$0xf]
      %v279 = vld [vmem:[%s232 + $0x90] sm:$0xf]
      %v280 = vld [vmem:[%s232 + $0x94] sm:$0xf]
      %v281 = vld [vmem:[%s232 + $0x98] sm:$0xf]
      %v282 = vld [vmem:[%s232 + $0x9c] sm:$0xf]
      %v283 = vld [vmem:[%s232 + $0xa0] sm:$0xf]
      %v284 = vld [vmem:[%s232 + $0xa4] sm:$0xf]
      %v285 = vld [vmem:[%s232 + $0xa8] sm:$0xf]
      %v286 = vld [vmem:[%s232 + $0xac] sm:$0xf]
      %v287 = vld [vmem:[%s232 + $0xb0] sm:$0xf]
      %v288 = vld [vmem:[%s232 + $0xb4] sm:$0xf]
      %v289 = vld [vmem:[%s232 + $0xb8] sm:$0xf]
      %v290 = vld [vmem:[%s232 + $0xbc] sm:$0xf]
      %v291 = vld [vmem:[%s232 + $0xc0] sm:$0xf]
      %v292 = vld [vmem:[%s232 + $0xc4] sm:$0xf]
      %v293 = vld [vmem:[%s232 + $0xc8] sm:$0xf]
      %v294 = vld [vmem:[%s232 + $0xcc] sm:$0xf]
      %v295 = vld [vmem:[%s232 + $0xd0] sm:$0xf]
      %v296 = vld [vmem:[%s232 + $0xd4] sm:$0xf]
      %v297 = vld [vmem:[%s232 + $0xd8] sm:$0xf]
      %v298 = vld [vmem:[%s232 + $0xdc] sm:$0xf]
      %v299 = vld [vmem:[%s232 + $0xe0] sm:$0xf]
      %v300 = vld [vmem:[%s232 + $0xe4] sm:$0xf]
      %v301 = vld [vmem:[%s232 + $0xe8] sm:$0xf]
      %v302 = vld [vmem:[%s232 + $0xec] sm:$0xf]
      %v303 = vld [vmem:[%s232 + $0xf0] sm:$0xf]
      %v304 = vld [vmem:[%s232 + $0xf4] sm:$0xf]
      %v305 = vld [vmem:[%s232 + $0xf8] sm:$0xf]
      %v306 = vld [vmem:[%s232 + $0xfc] sm:$0xf]
      %v309 = vunpack.c.l.b16 %v241
      %v310 = vunpack.c.h.b16 %v241
      %v311 = vunpack.c.l.b16 %v242
      %v312 = vunpack.c.h.b16 %v242
      %v313 = vpack.c.b16 %v309, %v309
      %v314 = vpack.c.b16 %v310, %v310
      %v315 = vpack.c.b16 %v311, %v311
      %v316 = vpack.c.b16 %v312, %v312
      %v385 = vunpack.c.l.b16 %v243
      %v386 = vunpack.c.l.b16 %v244
      %v387 = vunpack.c.l.b16 %v245
      %v388 = vunpack.c.l.b16 %v246
      %v389 = vunpack.c.l.b16 %v247
      %v390 = vunpack.c.l.b16 %v248
      %v391 = vunpack.c.l.b16 %v249
      %v392 = vunpack.c.l.b16 %v250
      %v393 = vunpack.c.l.b16 %v251
      %v394 = vunpack.c.l.b16 %v252
      %v395 = vunpack.c.l.b16 %v253
      %v396 = vunpack.c.l.b16 %v254
      %v397 = vunpack.c.l.b16 %v255
      %v398 = vunpack.c.l.b16 %v256
      %v399 = vunpack.c.l.b16 %v257
      %v400 = vunpack.c.l.b16 %v258
      %v401 = vunpack.c.l.b16 %v259
      %v402 = vunpack.c.l.b16 %v260
      %v403 = vunpack.c.l.b16 %v261
      %v404 = vunpack.c.l.b16 %v262
      %v405 = vunpack.c.l.b16 %v263
      %v406 = vunpack.c.l.b16 %v264
      %v407 = vunpack.c.l.b16 %v265
      %v408 = vunpack.c.l.b16 %v266
      %v409 = vunpack.c.l.b16 %v267
      %v410 = vunpack.c.l.b16 %v268
      %v411 = vunpack.c.l.b16 %v269
      %v412 = vunpack.c.l.b16 %v270
      %v413 = vunpack.c.l.b16 %v271
      %v414 = vunpack.c.l.b16 %v272
      %v415 = vunpack.c.l.b16 %v273
      %v416 = vunpack.c.l.b16 %v274
      %v417 = vunpack.c.l.b16 %v275
      %v418 = vunpack.c.l.b16 %v276
      %v419 = vunpack.c.l.b16 %v277
      %v420 = vunpack.c.l.b16 %v278
      %v421 = vunpack.c.l.b16 %v279
      %v422 = vunpack.c.l.b16 %v280
      %v423 = vunpack.c.l.b16 %v281
      %v424 = vunpack.c.l.b16 %v282
      %v425 = vunpack.c.l.b16 %v283
      %v426 = vunpack.c.l.b16 %v284
      %v427 = vunpack.c.l.b16 %v285
      %v428 = vunpack.c.l.b16 %v286
      %v429 = vunpack.c.l.b16 %v287
      %v430 = vunpack.c.l.b16 %v288
      %v431 = vunpack.c.l.b16 %v289
      %v432 = vunpack.c.l.b16 %v290
      %v433 = vunpack.c.l.b16 %v291
      %v434 = vunpack.c.l.b16 %v292
      %v435 = vunpack.c.l.b16 %v293
      %v436 = vunpack.c.l.b16 %v294
      %v437 = vunpack.c.l.b16 %v295
      %v438 = vunpack.c.l.b16 %v296
      %v439 = vunpack.c.l.b16 %v297
      %v440 = vunpack.c.l.b16 %v298
      %v441 = vunpack.c.l.b16 %v299
      %v442 = vunpack.c.l.b16 %v300
      %v443 = vunpack.c.l.b16 %v301
      %v444 = vunpack.c.l.b16 %v302
      %v445 = vunpack.c.l.b16 %v303
      %v446 = vunpack.c.l.b16 %v304
      %v447 = vunpack.c.l.b16 %v305
      %v448 = vunpack.c.l.b16 %v306
      %v449 = vpack.c.b16 %v386, %v385
      %v450 = vpack.c.b16 %v388, %v387
      %v451 = vpack.c.b16 %v390, %v389
      %v452 = vpack.c.b16 %v392, %v391
      %v453 = vpack.c.b16 %v394, %v393
      %v454 = vpack.c.b16 %v396, %v395
      %v455 = vpack.c.b16 %v398, %v397
      %v456 = vpack.c.b16 %v400, %v399
      %v457 = vpack.c.b16 %v402, %v401
      %v458 = vpack.c.b16 %v404, %v403
      %v459 = vpack.c.b16 %v406, %v405
      %v460 = vpack.c.b16 %v408, %v407
      %v461 = vpack.c.b16 %v410, %v409
      %v462 = vpack.c.b16 %v412, %v411
      %v463 = vpack.c.b16 %v414, %v413
      %v464 = vpack.c.b16 %v416, %v415
      %v465 = vpack.c.b16 %v418, %v417
      %v466 = vpack.c.b16 %v420, %v419
      %v467 = vpack.c.b16 %v422, %v421
      %v468 = vpack.c.b16 %v424, %v423
      %v469 = vpack.c.b16 %v426, %v425
      %v470 = vpack.c.b16 %v428, %v427
      %v471 = vpack.c.b16 %v430, %v429
      %v472 = vpack.c.b16 %v432, %v431
      %v473 = vpack.c.b16 %v434, %v433
      %v474 = vpack.c.b16 %v436, %v435
      %v475 = vpack.c.b16 %v438, %v437
      %v476 = vpack.c.b16 %v440, %v439
      %v477 = vpack.c.b16 %v442, %v441
      %v478 = vpack.c.b16 %v444, %v443
      %v479 = vpack.c.b16 %v446, %v445
      %v480 = vpack.c.b16 %v448, %v447
      %513 = vmatprep.subr.bf16.mxu0 0
      %514 = vmatpush1.bf16.msra.mxu0 %v449
      %515 = vmatprep.subr.bf16.mxu0 0
      %516 = vmatpush1.bf16.msra.mxu0 %v450
      %517 = vmatprep.subr.bf16.mxu0 0
      %518 = vmatpush1.bf16.msra.mxu0 %v451
      %519 = vmatprep.subr.bf16.mxu0 0
      %520 = vmatpush1.bf16.msra.mxu0 %v452
      %521 = vmatprep.subr.bf16.mxu0 0
      %522 = vmatpush1.bf16.msra.mxu0 %v453
      %523 = vmatprep.subr.bf16.mxu0 0
      %524 = vmatpush1.bf16.msra.mxu0 %v454
      %525 = vmatprep.subr.bf16.mxu0 0
      %526 = vmatpush1.bf16.msra.mxu0 %v455
      %527 = vmatprep.subr.bf16.mxu0 0
      %528 = vmatpush1.bf16.msra.mxu0 %v456
      %529 = vmatprep.subr.bf16.mxu0 0
      %530 = vmatpush1.bf16.msra.mxu0 %v457
      %531 = vmatprep.subr.bf16.mxu0 0
      %532 = vmatpush1.bf16.msra.mxu0 %v458
      %533 = vmatprep.subr.bf16.mxu0 0
      %534 = vmatpush1.bf16.msra.mxu0 %v459
      %535 = vmatprep.subr.bf16.mxu0 0
      %536 = vmatpush1.bf16.msra.mxu0 %v460
      %537 = vmatprep.subr.bf16.mxu0 0
      %538 = vmatpush1.bf16.msra.mxu0 %v461
      %539 = vmatprep.subr.bf16.mxu0 0
      %540 = vmatpush1.bf16.msra.mxu0 %v462
      %541 = vmatprep.subr.bf16.mxu0 0
      %542 = vmatpush1.bf16.msra.mxu0 %v463
      %543 = vmatprep.subr.bf16.mxu0 0
      %544 = vmatpush1.bf16.msra.mxu0 %v464
      %545 = vmatprep.mubr.bf16.mxu0 %v314
      %546 = vmatmul.mubr.bf16.gmra.mrb[0].mxu0 %v313
      %v547 = vpop.f32.mrb[0].mxu0
      %v548 = vadd.f32 0.0, %v547
      %v549 = vpop.f32.mrb[0].mxu0
      %v550 = vpop.f32.mrb[0].mxu0
      %v551 = vpop.f32.mrb[0].mxu0
      %552 = vdwg.mxu0
      %553 = vmatprep.subr.bf16.mxu0 0
      %554 = vmatpush1.bf16.msra.mxu0 %v465
      %555 = vmatprep.subr.bf16.mxu0 0
      %556 = vmatpush1.bf16.msra.mxu0 %v466
      %557 = vmatprep.subr.bf16.mxu0 0
      %558 = vmatpush1.bf16.msra.mxu0 %v467
      %559 = vmatprep.subr.bf16.mxu0 0
      %560 = vmatpush1.bf16.msra.mxu0 %v468
      %561 = vmatprep.subr.bf16.mxu0 0
      %562 = vmatpush1.bf16.msra.mxu0 %v469
      %563 = vmatprep.subr.bf16.mxu0 0
      %564 = vmatpush1.bf16.msra.mxu0 %v470
      %565 = vmatprep.subr.bf16.mxu0 0
      %566 = vmatpush1.bf16.msra.mxu0 %v471
      %567 = vmatprep.subr.bf16.mxu0 0
      %568 = vmatpush1.bf16.msra.mxu0 %v472
      %569 = vmatprep.subr.bf16.mxu0 0
      %570 = vmatpush1.bf16.msra.mxu0 %v473
      %571 = vmatprep.subr.bf16.mxu0 0
      %572 = vmatpush1.bf16.msra.mxu0 %v474
      %573 = vmatprep.subr.bf16.mxu0 0
      %574 = vmatpush1.bf16.msra.mxu0 %v475
      %575 = vmatprep.subr.bf16.mxu0 0
      %576 = vmatpush1.bf16.msra.mxu0 %v476
      %577 = vmatprep.subr.bf16.mxu0 0
      %578 = vmatpush1.bf16.msra.mxu0 %v477
      %579 = vmatprep.subr.bf16.mxu0 0
      %580 = vmatpush1.bf16.msra.mxu0 %v478
      %581 = vmatprep.subr.bf16.mxu0 0
      %582 = vmatpush1.bf16.msra.mxu0 %v479
      %583 = vmatprep.subr.bf16.mxu0 0
      %584 = vmatpush1.bf16.msra.mxu0 %v480
      %585 = vmatprep.mubr.bf16.mxu0 %v316
      %586 = vmatmul.mubr.bf16.gmra.mrb[0].mxu0 %v315
      %v587 = vpop.f32.mrb[0].mxu0
      %v588 = vadd.f32 %v548, %v587
      %v589 = vpop.f32.mrb[0].mxu0
      %v590 = vpop.f32.mrb[0].mxu0
      %v591 = vpop.f32.mrb[0].mxu0
      %592 = vdwg.mxu0
      %v593 = vadd.f32 %v240, %v588
      %594 = vst [vmem:[#allocation2] sm:$0xff] %v593
      %p595 = scmp.eq.s32.totalorder %s16, 3
      // Predicated region
      $region45: #{convnet_forward.3} parent=39 // pred_check
        %p596 = pneg %p595
      $region46: #{convnet_forward.3} parent=39 // pred_check_branch
        %598 = sbr.rel (%p596) target = $region48
      $region47: #{convnet_forward.3} parent=39 // pred_region
        %v599 = vld [vmem:[#allocation2] sm:$0xff]
        %v600 = vld [vmem:[%s2] sm:$0x1]
        %v602 = vlaneseq
        %v603 = vshrl.u32 %v602, 7
        %v604 = vsub.s32 0, %v603
        %v605 = vrot.slane %v600, %v604
        %v607 = vadd.f32 %v599, %v605
        %v608 = vmax.f32 %v607, 0.0
        %v609 = vld [vmem:[%s3] sm:$0xff]
        %v610 = vld [vmem:[%s3 + $0x8] sm:$0xff]
        %v611 = vld [vmem:[%s3 + $0x10] sm:$0xff]
        %v612 = vld [vmem:[%s3 + $0x18] sm:$0xff]
        %v613 = vld [vmem:[%s3 + $0x20] sm:$0xff]
        %v614 = vld [vmem:[%s3 + $0x28] sm:$0xff]
        %v615 = vld [vmem:[%s3 + $0x30] sm:$0xff]
        %v616 = vld [vmem:[%s3 + $0x38] sm:$0xff]
        %v617 = vld [vmem:[%s3 + $0x40] sm:$0xff]
        %v618 = vld [vmem:[%s3 + $0x48] sm:$0xff]
        %v619 = vld [vmem:[%s3 + $0x50] sm:$0xff]
        %v620 = vld [vmem:[%s3 + $0x58] sm:$0xff]
        %v621 = vld [vmem:[%s3 + $0x60] sm:$0xff]
        %v622 = vld [vmem:[%s3 + $0x68] sm:$0xff]
        %v623 = vld [vmem:[%s3 + $0x70] sm:$0xff]
        %v624 = vld [vmem:[%s3 + $0x78] sm:$0xff]
        %v625 = vld [vmem:[%s4] sm:$0x1]
        %v627 = vlaneseq
        %v628 = vshrl.u32 %v627, 7
        %v629 = vsub.s32 0, %v628
        %v630 = vrot.slane %v625, %v629
        %632 = vmatprep.subr.mxu0 0.0
        %633 = vmatpush1.msra.mxu0 %v609
        %634 = vmatprep.subr.mxu0 0.0
        %635 = vmatpush1.msra.mxu0 %v610
        %636 = vmatprep.subr.mxu0 0.0
        %637 = vmatpush1.msra.mxu0 %v611
        %638 = vmatprep.subr.mxu0 0.0
        %639 = vmatpush1.msra.mxu0 %v612
        %640 = vmatprep.subr.mxu0 0.0
        %641 = vmatpush1.msra.mxu0 %v613
        %642 = vmatprep.subr.mxu0 0.0
        %643 = vmatpush1.msra.mxu0 %v614
        %644 = vmatprep.subr.mxu0 0.0
        %645 = vmatpush1.msra.mxu0 %v615
        %646 = vmatprep.subr.mxu0 0.0
        %647 = vmatpush1.msra.mxu0 %v616
        %648 = vmatprep.subr.mxu0 0.0
        %649 = vmatpush1.msra.mxu0 %v617
        %650 = vmatprep.subr.mxu0 0.0
        %651 = vmatpush1.msra.mxu0 %v618
        %652 = vmatprep.subr.mxu0 0.0
        %653 = vmatpush1.msra.mxu0 %v619
        %654 = vmatprep.subr.mxu0 0.0
        %655 = vmatpush1.msra.mxu0 %v620
        %656 = vmatprep.subr.mxu0 0.0
        %657 = vmatpush1.msra.mxu0 %v621
        %658 = vmatprep.subr.mxu0 0.0
        %659 = vmatpush1.msra.mxu0 %v622
        %660 = vmatprep.subr.mxu0 0.0
        %661 = vmatpush1.msra.mxu0 %v623
        %662 = vmatprep.subr.mxu0 0.0
        %663 = vmatpush1.msra.mxu0 %v624
        %664 = vmatprep.subr.mxu0 0.0
        %665 = vmatpush1.msra.mxu0 0.0
        %666 = vmatprep.subr.mxu0 0.0
        %667 = vmatpush1.msra.mxu0 0.0
        %668 = vmatprep.subr.mxu0 0.0
        %669 = vmatpush1.msra.mxu0 0.0
        %670 = vmatprep.subr.mxu0 0.0
        %671 = vmatpush1.msra.mxu0 0.0
        %672 = vmatprep.subr.mxu0 0.0
        %673 = vmatpush1.msra.mxu0 0.0
        %674 = vmatprep.subr.mxu0 0.0
        %675 = vmatpush1.msra.mxu0 0.0
        %676 = vmatprep.subr.mxu0 0.0
        %677 = vmatpush1.msra.mxu0 0.0
        %678 = vmatprep.subr.mxu0 0.0
        %679 = vmatpush1.msra.mxu0 0.0
        %680 = vmatprep.subr.mxu0 0.0
        %681 = vmatpush1.msra.mxu0 0.0
        %682 = vmatprep.subr.mxu0 0.0
        %683 = vmatpush1.msra.mxu0 0.0
        %684 = vmatprep.subr.mxu0 0.0
        %685 = vmatpush1.msra.mxu0 0.0
        %686 = vmatprep.subr.mxu0 0.0
        %687 = vmatpush1.msra.mxu0 0.0
        %688 = vmatprep.subr.mxu0 0.0
        %689 = vmatpush1.msra.mxu0 0.0
        %690 = vmatprep.subr.mxu0 0.0
        %691 = vmatpush1.msra.mxu0 0.0
        %692 = vmatprep.subr.mxu0 0.0
        %693 = vmatpush1.msra.mxu0 0.0
        %694 = vmatprep.subr.mxu0 0.0
        %695 = vmatpush1.msra.mxu0 0.0
        %696 = vmatprep.mubr.f32.mxu0 0.0
        %697 = vmatmul.mubr.f32.gmra.mrb[0].mxu0 %v608
        %v698 = vpop.f32.mrb[0].mxu0
        %v699 = vadd.f32 %v630, %v698
        %v700 = vpop.f32.mrb[0].mxu0
        %701 = vdwg.mxu0
        %v702 = vsub.f32 0.0, %v699
        %v703 = vmul.f32 %v702, 1.442695
        %v704 = vpow.pop %v703
        %v705 = vadd.f32 %v704, 1.0
        %v706 = vrcp.pop %v705
        %707 = vst [vmem:[%s5] sm:$0xff] %v706
      $region48: #{convnet_forward.3} parent=39 // pred_fallthru
        _
      // Predicated region
      $region49: #{convnet_forward.3} parent=39 // pred_check
        %p708 = pneg %p144
      $region50: #{convnet_forward.3} parent=39 // pred_check_branch
        %710 = sbr.rel (%p708) target = $region52
      $region51: #{convnet_forward.3} parent=39 // pred_region
        _
      $region52: #{convnet_forward.3} parent=39 // pred_fallthru
        _
      // Predicated region
      $region53: #{convnet_forward.3} parent=39 // pred_check
        %p711 = pneg %p144
      $region54: #{convnet_forward.3} parent=39 // pred_check_branch
        %713 = sbr.rel (%p711) target = $region56
      $region55: #{convnet_forward.3} parent=39 // pred_region
        _
      $region56: #{convnet_forward.3} parent=39 // pred_fallthru
        _
    $region40: #{convnet_forward.3} parent=5 // pred_fallthru
      _
    %p714 = scmp.le.s32.totalorder 2, %s11
    // Predicated region
    $region57: #{convnet_forward.3} parent=5 // pred_check
      %p715 = pneg %p714
    $region58: #{convnet_forward.3} parent=5 // pred_check_branch
      %717 = sbr.rel (%p715) target = $region60
    $region59: #{convnet_forward.3} parent=5 // pred_region
      %s718 = ssub.s32 %s11, 2
    $region60: #{convnet_forward.3} parent=5 // pred_fallthru
      _
  $region6: #{convnet_forward.3} parent=0 // loop_footer
    %s15 = sadd.s32 1, %s11
  $region7: #{convnet_forward.3} parent=0 // loop_footer_branch
    %10 = sbr.rel target = $region3
  $region8: #{convnet_forward.3} parent=0 // loop_exit
    _

</llo_original>
